<compile_context>
chip_gen: v7x
topology: tpu7x:2x2x1
jax: 0.10.0
libtpu: 0.0.40
codegen_flags: <defaults>
</compile_context>

<pallas_src>
import jax
import jax.numpy as jnp
from jax.experimental import pallas as pl
from jax.experimental.pallas import tpu as pltpu

BN_EPS = 1e-5


def _conv_affine_kernel(x_ref, w_ref, shift_ref, o_ref):
    # x_ref:     (Cin, tileN)   points on lanes, channels on sublanes (native NCW slice)
    # w_ref:     (Cout, Cin)    conv weight pre-scaled by gamma * inv_std
    # shift_ref: (Cout, 1)      beta - mean_y * scale
    # o_ref:     (Cout, tileN)  written straight into the NCW output
    y = jnp.dot(w_ref[...], x_ref[...], preferred_element_type=jnp.float32)
    o_ref[...] = (y + shift_ref[...]).astype(o_ref.dtype)


def _pick_tile_n(n, cout, *, block_bytes=2 << 20, dtype_bytes=4):
    """Points-axis tile.

    Either the full axis (a full-extent block is always legal, regardless of 128-divisibility)
    when the (Cout, n) output block fits the per-buffer VMEM budget, or the largest multiple of
    128 within the budget.  In the latter case the last grid step may cover a partial block.
    """
    cap = (block_bytes // (cout * dtype_bytes)) // 128 * 128
    cap = max(cap, 128)
    return n if n <= cap else cap


def point_trans_feat_forward(x, conv_w, conv_b, bn_gamma, bn_beta, *,
                             block_bytes=2 << 20, out_dtype=jnp.float32):
    """x: (B, C_in, N) -> (B, C_out, N), plus (reg_stn, reg_fstn) == (0, 0).

    conv_w: (C_out, C_in)  (PyTorch Conv1d weight with the k=1 dim squeezed)
    conv_b: (C_out,)       -- unused: it cancels exactly under training-mode BatchNorm
    bn_gamma, bn_beta: (C_out,)
    out_dtype: set to jnp.bfloat16 to halve the dominant HBM writeback (numerics change
               vs the f32 PyTorch reference).
    """
    del conv_b  # exactly cancelled by the training-mode BN mean subtraction
    B, Cin, N = x.shape
    Cout = conv_w.shape[0]
    R = B * N

    xf = x.astype(jnp.float32)
    w = conv_w.astype(jnp.float32)

    # ---- BN statistics derived in Cin space (tiny XLA reductions; read only x) ----
    mean_x = jnp.mean(xf, axis=(0, 2))                                  # (Cin,)
    xc = xf - mean_x[None, :, None]                                     # centered (no E[x^2]-m^2)
    cov_x = jnp.einsum("bcn,bdn->cd", xc, xc) / R                       # (Cin, Cin), biased
    mean_y = w @ mean_x                                                  # conv bias cancels
    var_y = jnp.einsum("oc,cd,od->o", w, cov_x, w)                       # diag(W Cov_x W^T)
    inv_std = jax.lax.rsqrt(var_y + BN_EPS)
    scale = bn_gamma.astype(jnp.float32) * inv_std                       # (Cout,)
    shift = bn_beta.astype(jnp.float32) - mean_y * scale                 # (Cout,)
    w_scaled = w * scale[:, None]                                        # (Cout, Cin)
    shift2 = shift.reshape(Cout, 1)

    # ---- Single Pallas pass: folded conv + affine, written straight to NCW output ----
    tn = _pick_tile_n(N, Cout, block_bytes=block_bytes)
    n_tiles = pl.cdiv(N, tn)
    out_bytes = jnp.dtype(out_dtype).itemsize

    y = pl.pallas_call(
        _conv_affine_kernel,
        out_shape=jax.ShapeDtypeStruct((B, Cout, N), out_dtype),
        grid=(B, n_tiles),
        in_specs=[
            pl.BlockSpec((None, Cin, tn), lambda b, t: (b, 0, t)),
            pl.BlockSpec((Cout, Cin), lambda b, t: (0, 0)),
            pl.BlockSpec((Cout, 1), lambda b, t: (0, 0)),
        ],
        out_specs=pl.BlockSpec((None, Cout, tn), lambda b, t: (b, 0, t)),
        compiler_params=pltpu.CompilerParams(
            dimension_semantics=("parallel", "parallel")),
        cost_estimate=pl.CostEstimate(
            flops=2 * R * Cin * Cout + R * Cout,
            transcendentals=0,
            bytes_accessed=4 * B * Cin * N + out_bytes * B * Cout * N
            + 4 * (Cout * Cin + Cout),
        ),
    )(xf, w_scaled, shift2)

    reg_stn = 0   # rotate=False
    reg_fstn = 0  # feature_transform=False
    return y, reg_stn, reg_fstn


def _reference(x, conv_w, conv_b, bn_gamma, bn_beta):
    # Pure-JAX reference of Conv1d(k=1) + BatchNorm1d(training) in NCW layout.
    y = jnp.einsum("oc,bcn->bon", conv_w, x) + conv_b[None, :, None]
    mean = jnp.mean(y, axis=(0, 2), keepdims=True)
    var = jnp.mean((y - mean) ** 2, axis=(0, 2), keepdims=True)
    y = (y - mean) / jnp.sqrt(var + BN_EPS)
    return y * bn_gamma[None, :, None] + bn_beta[None, :, None]


def _run_case(B, Cin, N, Cout, key, *, block_bytes=2 << 20):
    kx, kw, kb, kg, kbe = jax.random.split(key, 5)
    x = jax.random.normal(kx, (B, Cin, N), dtype=jnp.float32)
    # Off-center coordinates to exercise the centered-variance path.
    x = x + jnp.arange(Cin, dtype=jnp.float32)[None, :, None] * 3.0
    conv_w = jax.random.normal(kw, (Cout, Cin), dtype=jnp.float32) * 0.1
    conv_b = jax.random.normal(kb, (Cout,), dtype=jnp.float32) * 0.1
    bn_gamma = 1.0 + 0.1 * jax.random.normal(kg, (Cout,), dtype=jnp.float32)
    bn_beta = 0.1 * jax.random.normal(kbe, (Cout,), dtype=jnp.float32)

    y, reg_stn, reg_fstn = point_trans_feat_forward(
        x, conv_w, conv_b, bn_gamma, bn_beta, block_bytes=block_bytes)
    y = jax.block_until_ready(y)

    y_ref = _reference(x, conv_w, conv_b, bn_gamma, bn_beta)
    assert y.shape == (B, Cout, N), y.shape
    err = float(jnp.max(jnp.abs(y - y_ref)))
    assert jnp.allclose(y, y_ref, atol=1e-4, rtol=1e-4), err
    assert reg_stn == 0 and reg_fstn == 0


if __name__ == "__main__":
    # Module defaults: input_dim=3, hidden_d=64.
    key = jax.random.PRNGKey(0)
    k1, k2, k3 = jax.random.split(key, 3)
    # Default budget: whole points axis in one lane-dense block per batch element.
    _run_case(B=2, Cin=3, N=512, Cout=64, key=k1)
    # Small budget -> multi-tile path: 128-multiple tiles, grid (2, 2).
    _run_case(B=2, Cin=3, N=512, Cout=64, key=k1, block_bytes=64 << 10)
    # Tiny N: full-extent block (N not a multiple of 128).
    _run_case(B=2, Cin=3, N=16, Cout=64, key=k2)
    # Non-dividing N with forced 128-wide tiles -> partial tail block (OOB lanes dropped).
    _run_case(B=1, Cin=3, N=200, Cout=64, key=k3, block_bytes=32 << 10)
    print("KERNEL_OK")
</pallas_src>

<mosaic_0001>
module attributes {stable_mosaic.version = 11 : i64} {
  func.func @_conv_affine_kernel(%arg0: i32, %arg1: i32, %arg2: memref<1x3x512xf32, #tpu.memory_space<vmem>>, %arg3: memref<64x3xf32, #tpu.memory_space<vmem>>, %arg4: memref<64x1xf32, #tpu.memory_space<vmem>>, %arg5: memref<1x64x512xf32, #tpu.memory_space<vmem>>) attributes {dimension_semantics = [#tpu.dimension_semantics<parallel>, #tpu.dimension_semantics<parallel>], iteration_bounds = array<i64: 2, 1>, scalar_prefetch = 0 : i64, scratch_operands = 0 : i64, tpu.core_type = #tpu.core_type<tc>, window_params = [{transform_indices = @transform_0, window_bounds = array<i64: 1, 3, 512>}, {pipeline_mode = #tpu.pipeline_mode<synchronous>, transform_indices = @transform_1, window_bounds = array<i64: 64, 3>}, {pipeline_mode = #tpu.pipeline_mode<synchronous>, transform_indices = @transform_2, window_bounds = array<i64: 64, 1>}, {transform_indices = @transform_3, window_bounds = array<i64: 1, 64, 512>}]} {
    %c0 = arith.constant 0 : index
    %c0_0 = arith.constant 0 : index
    %0 = vector.load %arg3[%c0, %c0_0] : memref<64x3xf32, #tpu.memory_space<vmem>>, vector<64x3xf32>
    %c0_1 = arith.constant 0 : index
    %c0_2 = arith.constant 0 : index
    %c0_3 = arith.constant 0 : index
    %1 = vector.load %arg2[%c0_1, %c0_2, %c0_3] : memref<1x3x512xf32, #tpu.memory_space<vmem>>, vector<1x3x512xf32>
    %2 = vector.shape_cast %1 : vector<1x3x512xf32> to vector<3x512xf32>
    %cst = arith.constant dense<0.000000e+00> : vector<64x512xf32>
    %3 = tpu.matmul %0, %2, %cst {dimension_numbers = #tpu.dot_dimension_numbers<[1], [0], [0], [1], [0, 0, 1, 1], [], []>} : vector<64x3xf32>, vector<3x512xf32>, vector<64x512xf32> -> vector<64x512xf32>
    %c0_4 = arith.constant 0 : index
    %c0_5 = arith.constant 0 : index
    %4 = vector.load %arg4[%c0_4, %c0_5] : memref<64x1xf32, #tpu.memory_space<vmem>>, vector<64x1xf32>
    %5 = vector.broadcast %4 : vector<64x1xf32> to vector<64x512xf32>
    %6 = arith.addf %3, %5 : vector<64x512xf32>
    %c0_6 = arith.constant 0 : index
    %c0_7 = arith.constant 0 : index
    %c0_8 = arith.constant 0 : index
    %7 = vector.load %arg5[%c0_6, %c0_7, %c0_8] : memref<1x64x512xf32, #tpu.memory_space<vmem>>, vector<1x64x512xf32>
    %8 = vector.shape_cast %7 : vector<1x64x512xf32> to vector<64x512xf32>
    %9 = vector.shape_cast %6 : vector<64x512xf32> to vector<1x64x512xf32>
    tpu.vector_store %arg5[%c0_6, %c0_7, %c0_8], %9 {strides = array<i32>} : memref<1x64x512xf32, #tpu.memory_space<vmem>>, vector<1x64x512xf32>,
    return
  }
  func.func @transform_0(%arg0: i32, %arg1: i32) -> (i32, i32, i32) {
    %c0_i32 = arith.constant 0 : i32
    %c0_i32_0 = arith.constant 0 : i32
    return %arg0, %c0_i32, %arg1 : i32, i32, i32
  }
  func.func @transform_1(%arg0: i32, %arg1: i32) -> (i32, i32) {
    %c0_i32 = arith.constant 0 : i32
    %c0_i32_0 = arith.constant 0 : i32
    %c0_i32_1 = arith.constant 0 : i32
    return %c0_i32, %c0_i32_0 : i32, i32
  }
  func.func @transform_2(%arg0: i32, %arg1: i32) -> (i32, i32) {
    %c0_i32 = arith.constant 0 : i32
    %c0_i32_0 = arith.constant 0 : i32
    %c0_i32_1 = arith.constant 0 : i32
    return %c0_i32, %c0_i32_0 : i32, i32
  }
  func.func @transform_3(%arg0: i32, %arg1: i32) -> (i32, i32, i32) {
    %c0_i32 = arith.constant 0 : i32
    %c0_i32_0 = arith.constant 0 : i32
    return %arg0, %c0_i32, %arg1 : i32, i32, i32
  }
}

</mosaic_0001>

<llo_original>
// kernel: tpu_custom_call.1
$region0: #{tpu_custom_call.1}
  #allocation0 [shape = 'u32[]', space=smem, size = 0x4, offset = 0x4, fixed_abs, tag = 'smem constant byte address 0x4 - core index']
  #allocation1 [shape = 'u32[144,128]{1,0:T(1,128)}', space=vmem, size = 0x12000, scoped, tag = 'internal scratch']
  %s0 = inlined_call_operand.vmem [shape: f32[2,3,512], index: 0, kind: input, shape index: {}]
  %s1 = inlined_call_operand.vmem [shape: f32[64,3], index: 1, kind: input, shape index: {}]
  %s2 = inlined_call_operand.vmem [shape: f32[64,1], index: 2, kind: input, shape index: {}]
  %s3 = inlined_call_operand.hbm [shape: f32[2,64,512], index: 3, kind: output, shape index: {}]
  %s4 = sld [smem:[#allocation0]]
  $region45: #{tpu_custom_call.1} parent=0
    _
  %s6 = ssub.s32 1, %s4
  %s7 = scalar_select 0, %s6, %s4
  $region1: #{tpu_custom_call.1} parent=0
    #allocation2 [shape = 'u8[262144]{0}', space=vmem, size = 0x40000, scoped, tag = 'output window, operand 0']
    #allocation3 [shape = 's32[2]{0}', space=sflag, size = 0x8, scoped, tag = 'scoped memory for tpu_custom_call.1']
    %8 = vsyncpa [#allocation3], 0
    %s9 = scalar_lea.sflag [#allocation3], 1
    %10 = vsyncpa %s9, 0
    loop: start=0, step=1, limit=4
    $region2: #{tpu_custom_call.1} parent=1 // loop_pre_header
      _
    $region3: #{tpu_custom_call.1} parent=1 // loop_header
      %s12 = sphi 0, %s16
      %p13 = scmp.ge.s32.totalorder %s12, 4
      %s19 = sphi 0, %s31
      %s20 = sphi 0, %s27
      %s21 = sphi 0, %s19
      %s22 = sphi 0, %s20
      %s23 = sphi 0, %s21
      %s24 = sphi 0, %s22
      %s36 = sphi 0, %s38
      %s39 = sphi 0, %s36
      %s40 = sphi 0, %s39
      %s56 = sphi 0, %s40
      %s60 = sphi 0, %s60
      %s62 = sphi 0, %s60
      %s63 = sphi 0, %s62
      %s77 = sphi 0, %s63
      %s81 = sphi 0, %s81
      %s83 = sphi 0, %s81
      %s84 = sphi 0, %s83
      %s98 = sphi 0, %s84
      %s106 = sphi 0, %s108
      %s109 = sphi 0, %s106
      %s110 = sphi 0, %s109
      %s126 = sphi 0, %s110
    $region4: #{tpu_custom_call.1} parent=1 // loop_header_branch
      %15 = sbr.rel (%p13) target = $region8
    $region5: #{tpu_custom_call.1} parent=1 // loop_body
      %s17 = ssub.s32 %s12, 1
      %s18 = ssub.s32 %s12, 2
      %s25 = sadd.s32 1, %s20
      %p26 = scmp.ge.s32.totalorder %s25, 1
      %s27 = scalar_select %p26, 0, %s25
      %s28 = sadd.s32 1, %s19
      %s29 = scalar_select %p26, %s28, %s19
      %p30 = scmp.ge.s32.totalorder %s29, 2
      %s31 = scalar_select %p30, 0, %s29
      %s32 = ssub.s32 %s19, %s31
      %s33 = ssub.s32 %s20, %s27
      %s34 = sor.u32 %s32, %s33
      %p35 = scmp.eq.s32.totalorder %s34, 0
      %s37 = sadd.s32 %s36, 1
      %s38 = scalar_select %p35, %s36, %s37
      %p41 = pneg %p35
      %p42 = scmp.eq.s32.totalorder %s12, 1
      %p43 = por %p41, %p42
      %p44 = scmp.ne.s32.totalorder %s36, %s39
      %p45 = scmp.eq.s32.totalorder %s12, 0
      %p46 = por %p44, %p45
      %p47 = scmp.ne.s32.totalorder %s36, %s39
      %p48 = scmp.eq.s32.totalorder %s17, 1
      %p49 = por %p47, %p48
      %p50 = scmp.ne.s32.totalorder %s39, %s40
      %p51 = scmp.eq.s32.totalorder %s17, 0
      %p52 = por %p50, %p51
      %p53 = scmp.ne.s32.totalorder %s39, %s40
      %p54 = scmp.eq.s32.totalorder %s18, 1
      %p55 = por %p53, %p54
      %p57 = scmp.ne.s32.totalorder %s40, %s56
      %p58 = scmp.eq.s32.totalorder %s18, 0
      %p59 = por %p57, %p58
      %s61 = sadd.s32 %s60, 1
      %p64 = scmp.eq.s32.totalorder %s12, 1
      %p65 = scmp.ne.s32.totalorder %s60, %s62
      %p66 = scmp.eq.s32.totalorder %s12, 0
      %p67 = por %p65, %p66
      %p68 = scmp.ne.s32.totalorder %s60, %s62
      %p69 = scmp.eq.s32.totalorder %s17, 1
      %p70 = por %p68, %p69
      %p71 = scmp.ne.s32.totalorder %s62, %s63
      %p72 = scmp.eq.s32.totalorder %s17, 0
      %p73 = por %p71, %p72
      %p74 = scmp.ne.s32.totalorder %s62, %s63
      %p75 = scmp.eq.s32.totalorder %s18, 1
      %p76 = por %p74, %p75
      %p78 = scmp.ne.s32.totalorder %s63, %s77
      %p79 = scmp.eq.s32.totalorder %s18, 0
      %p80 = por %p78, %p79
      %s82 = sadd.s32 %s81, 1
      %p85 = scmp.eq.s32.totalorder %s12, 1
      %p86 = scmp.ne.s32.totalorder %s81, %s83
      %p87 = scmp.eq.s32.totalorder %s12, 0
      %p88 = por %p86, %p87
      %p89 = scmp.ne.s32.totalorder %s81, %s83
      %p90 = scmp.eq.s32.totalorder %s17, 1
      %p91 = por %p89, %p90
      %p92 = scmp.ne.s32.totalorder %s83, %s84
      %p93 = scmp.eq.s32.totalorder %s17, 0
      %p94 = por %p92, %p93
      %p95 = scmp.ne.s32.totalorder %s83, %s84
      %p96 = scmp.eq.s32.totalorder %s18, 1
      %p97 = por %p95, %p96
      %p99 = scmp.ne.s32.totalorder %s84, %s98
      %p100 = scmp.eq.s32.totalorder %s18, 0
      %p101 = por %p99, %p100
      %s102 = ssub.s32 %s19, %s31
      %s103 = ssub.s32 %s20, %s27
      %s104 = sor.u32 %s102, %s103
      %p105 = scmp.eq.s32.totalorder %s104, 0
      %s107 = sadd.s32 %s106, 1
      %s108 = scalar_select %p105, %s106, %s107
      %p111 = pneg %p105
      %p112 = scmp.eq.s32.totalorder %s12, 1
      %p113 = por %p111, %p112
      %p114 = scmp.ne.s32.totalorder %s106, %s109
      %p115 = scmp.eq.s32.totalorder %s12, 0
      %p116 = por %p114, %p115
      %p117 = scmp.ne.s32.totalorder %s106, %s109
      %p118 = scmp.eq.s32.totalorder %s17, 1
      %p119 = por %p117, %p118
      %p120 = scmp.ne.s32.totalorder %s109, %s110
      %p121 = scmp.eq.s32.totalorder %s17, 0
      %p122 = por %p120, %p121
      %p123 = scmp.ne.s32.totalorder %s109, %s110
      %p124 = scmp.eq.s32.totalorder %s18, 1
      %p125 = por %p123, %p124
      %p127 = scmp.ne.s32.totalorder %s110, %s126
      %p128 = scmp.eq.s32.totalorder %s18, 0
      %p129 = por %p127, %p128
      %p130 = scmp.le.s32.totalorder 1, %s12
      %p131 = scmp.lt.s32.totalorder %s12, 3
      %p132 = pnand %p130, %p131
      %p133 = pneg %p132
      // Predicated region
      $region9: #{tpu_custom_call.1} parent=5 // pred_check
        _
      $region10: #{tpu_custom_call.1} parent=5 // pred_check_branch
        %135 = sbr.rel (%p132) target = $region12
      $region11: #{tpu_custom_call.1} parent=5 // pred_region
        %s136 = ssub.s32 %s12, 1
        // Predicated region
        $region13: #{tpu_custom_call.1} parent=11 // pred_check
          %p137 = pneg %p73
        $region14: #{tpu_custom_call.1} parent=11 // pred_check_branch
          %139 = sbr.rel (%p137) target = $region16
        $region15: #{tpu_custom_call.1} parent=11 // pred_region
          _
        $region16: #{tpu_custom_call.1} parent=11 // pred_fallthru
          _
        // Predicated region
        $region17: #{tpu_custom_call.1} parent=11 // pred_check
          %p140 = pneg %p94
        $region18: #{tpu_custom_call.1} parent=11 // pred_check_branch
          %142 = sbr.rel (%p140) target = $region20
        $region19: #{tpu_custom_call.1} parent=11 // pred_region
          _
        $region20: #{tpu_custom_call.1} parent=11 // pred_fallthru
          _
      $region12: #{tpu_custom_call.1} parent=5 // pred_fallthru
        _
      %p143 = scmp.lt.s32.totalorder %s12, 2
      // Predicated region
      $region21: #{tpu_custom_call.1} parent=5 // pred_check
        %p144 = pneg %p143
      $region22: #{tpu_custom_call.1} parent=5 // pred_check_branch
        %146 = sbr.rel (%p144) target = $region24
      $region23: #{tpu_custom_call.1} parent=5 // pred_region
        // Predicated region
        $region25: #{tpu_custom_call.1} parent=23 // pred_check
          %p147 = pneg %p46
        $region26: #{tpu_custom_call.1} parent=23 // pred_check_branch
          %149 = sbr.rel (%p147) target = $region28
        $region27: #{tpu_custom_call.1} parent=23 // pred_region
          %s150 = smul.u32 4, %s20
          %p151 = scmp.lt.s32.totalorder %s19, 1
          %s152 = scalar_select %p151, %s19, 1
          %p153 = scmp.lt.s32.totalorder %s150, 3
          %s154 = scalar_select %p153, %s150, 3
          %s155 = smul.addr %s152, 4
          %s156 = sadd.s32 %s154, %s155
          %s157 = smul.addr %s156, 4
          %s158 = scalar_lea.vmem %s0, %s157
          %s159 = smul.u32 4, %s20
        $region28: #{tpu_custom_call.1} parent=23 // pred_fallthru
          _
      $region24: #{tpu_custom_call.1} parent=5 // pred_fallthru
        _
      %p160 = scmp.le.s32.totalorder 1, %s12
      %p161 = scmp.lt.s32.totalorder %s12, 3
      %p162 = pnand %p160, %p161
      %p163 = pneg %p162
      // Predicated region
      $region29: #{tpu_custom_call.1} parent=5 // pred_check
        _
      $region30: #{tpu_custom_call.1} parent=5 // pred_check_branch
        %165 = sbr.rel (%p162) target = $region32
      $region31: #{tpu_custom_call.1} parent=5 // pred_region
        %s166 = ssub.s32 %s12, 1
        %s167 = smul.u32 4, %s22
        %p168 = scmp.lt.s32.totalorder %s21, 1
        %s169 = scalar_select %p168, %s21, 1
        %p170 = scmp.lt.s32.totalorder %s167, 3
        %s171 = scalar_select %p170, %s167, 3
        %s172 = smul.addr %s169, 4
        %s173 = sadd.s32 %s171, %s172
        %s174 = smul.addr %s173, 4
        %s175 = scalar_lea.vmem %s0, %s174
        %p176 = pneg %p52
        %p177 = pneg %p49
        %p178 = pneg %p73
        %p179 = pneg %p70
        %p180 = pneg %p94
        %p181 = pneg %p91
        %p182 = pneg %p122
        %p183 = pneg %p119
        %s184 = sand.u32 %s109, 1
        %s185 = scalar_lea.sflag [#allocation3], %s184
        %s186 = sand.u32 %s109, 1
        %s187 = smul.addr %s186, 256
        %s188 = scalar_lea.vmem [#allocation2], %s187
        %s189 = smul.u32 4, %s22
        %p190 = scmp.lt.s32.totalorder %s21, 1
        %s191 = scalar_select %p190, %s21, 1
        %p192 = scmp.lt.s32.totalorder %s189, 3
        %s193 = scalar_select %p192, %s189, 3
        %s194 = smul.addr %s191, 4
        %s195 = sadd.s32 %s193, %s194
        %s196 = smul.addr %s195, 4
        %s197 = scalar_lea.vmem %s0, %s196
        %s198 = smul.u32 4, %s22
        %s199 = smul.u32 4, %s22
        %v200 = vld [vmem:[%s1] sm:$0xff]
        %v201 = vld [vmem:[%s1 + $0x8] sm:$0xff]
        %v202 = vld [vmem:[%s1 + $0x10] sm:$0xff]
        %v203 = vld [vmem:[%s1 + $0x18] sm:$0xff]
        %v204 = vld [vmem:[%s1 + $0x20] sm:$0xff]
        %v205 = vld [vmem:[%s1 + $0x28] sm:$0xff]
        %v206 = vld [vmem:[%s1 + $0x30] sm:$0xff]
        %v207 = vld [vmem:[%s1 + $0x38] sm:$0xff]
        %v208 = vld [vmem:[%s197] sm:$0x77]
        %v209 = vld [vmem:[%s197 + $0x8] sm:$0x77]
        %v210 = vld [vmem:[%s2] sm:$0xff]
        %v211 = vld [vmem:[%s2 + $0x8] sm:$0xff]
        %v212 = vld [vmem:[%s2 + $0x10] sm:$0xff]
        %v213 = vld [vmem:[%s2 + $0x18] sm:$0xff]
        %v214 = vld [vmem:[%s2 + $0x20] sm:$0xff]
        %v215 = vld [vmem:[%s2 + $0x28] sm:$0xff]
        %v216 = vld [vmem:[%s2 + $0x30] sm:$0xff]
        %v217 = vld [vmem:[%s2 + $0x38] sm:$0xff]
        %219 = vset.pattern.permute.xlu0 0
        %220 = vperm.xlu0 %219, %v210
        %v221 = vpop.permute.xlu0 %220
        %224 = vset.pattern.permute.xlu0 0
        %225 = vperm.xlu0 %224, %v211
        %v226 = vpop.permute.xlu0 %225
        %229 = vset.pattern.permute.xlu0 0
        %230 = vperm.xlu0 %229, %v212
        %v231 = vpop.permute.xlu0 %230
        %234 = vset.pattern.permute.xlu0 0
        %235 = vperm.xlu0 %234, %v213
        %v236 = vpop.permute.xlu0 %235
        %239 = vset.pattern.permute.xlu0 0
        %240 = vperm.xlu0 %239, %v214
        %v241 = vpop.permute.xlu0 %240
        %244 = vset.pattern.permute.xlu0 0
        %245 = vperm.xlu0 %244, %v215
        %v246 = vpop.permute.xlu0 %245
        %249 = vset.pattern.permute.xlu0 0
        %250 = vperm.xlu0 %249, %v216
        %v251 = vpop.permute.xlu0 %250
        %254 = vset.pattern.permute.xlu0 0
        %255 = vperm.xlu0 %254, %v217
        %v256 = vpop.permute.xlu0 %255
        %v260 = vcombine.high %v208, %v208
        %v261 = vcombine.high %v209, %v209
        %vm262 = vcmask 23552
        %v264 = vsel %vm262, %v200, 0
        %v267 = vsel %vm262, %v201, 0
        %v270 = vsel %vm262, %v202, 0
        %v273 = vsel %vm262, %v203, 0
        %v276 = vsel %vm262, %v204, 0
        %v279 = vsel %vm262, %v205, 0
        %v282 = vsel %vm262, %v206, 0
        %v285 = vsel %vm262, %v207, 0
        %vm287 = vcmask 1042432
        %v288 = vsel %vm287, %v208, 0
        %v290 = vsel %vm287, %v260, 0
        %v292 = vsel %vm287, %v209, 0
        %v294 = vsel %vm287, %v261, 0
        %296 = vmatprep.subr.mxu0 %v290
        %297 = vmatpush1.msra.mxu0 %v288
        %298 = vmatprep.subr.mxu0 0.0
        %299 = vmatpush1.msra.mxu0 0.0
        %300 = vmatprep.subr.mxu0 0.0
        %301 = vmatpush1.msra.mxu0 0.0
        %302 = vmatprep.subr.mxu0 0.0
        %303 = vmatpush1.msra.mxu0 0.0
        %304 = vmatprep.subr.mxu0 0.0
        %305 = vmatpush1.msra.mxu0 0.0
        %306 = vmatprep.subr.mxu0 0.0
        %307 = vmatpush1.msra.mxu0 0.0
        %308 = vmatprep.subr.mxu0 0.0
        %309 = vmatpush1.msra.mxu0 0.0
        %310 = vmatprep.subr.mxu0 0.0
        %311 = vmatpush1.msra.mxu0 0.0
        %312 = vmatprep.subr.mxu0 0.0
        %313 = vmatpush1.msra.mxu0 0.0
        %314 = vmatprep.subr.mxu0 0.0
        %315 = vmatpush1.msra.mxu0 0.0
        %316 = vmatprep.subr.mxu0 0.0
        %317 = vmatpush1.msra.mxu0 0.0
        %318 = vmatprep.subr.mxu0 0.0
        %319 = vmatpush1.msra.mxu0 0.0
        %320 = vmatprep.subr.mxu0 0.0
        %321 = vmatpush1.msra.mxu0 0.0
        %322 = vmatprep.subr.mxu0 0.0
        %323 = vmatpush1.msra.mxu0 0.0
        %324 = vmatprep.subr.mxu0 0.0
        %325 = vmatpush1.msra.mxu0 0.0
        %326 = vmatprep.subr.mxu0 0.0
        %327 = vmatpush1.msra.mxu0 0.0
        %328 = vmatprep.subr.mxu0 0.0
        %329 = vmatpush1.msra.mxu0 0.0
        %330 = vmatprep.subr.mxu0 0.0
        %331 = vmatpush1.msra.mxu0 0.0
        %332 = vmatprep.subr.mxu0 0.0
        %333 = vmatpush1.msra.mxu0 0.0
        %334 = vmatprep.subr.mxu0 0.0
        %335 = vmatpush1.msra.mxu0 0.0
        %336 = vmatprep.subr.mxu0 0.0
        %337 = vmatpush1.msra.mxu0 0.0
        %338 = vmatprep.subr.mxu0 0.0
        %339 = vmatpush1.msra.mxu0 0.0
        %340 = vmatprep.subr.mxu0 0.0
        %341 = vmatpush1.msra.mxu0 0.0
        %342 = vmatprep.subr.mxu0 0.0
        %343 = vmatpush1.msra.mxu0 0.0
        %344 = vmatprep.subr.mxu0 0.0
        %345 = vmatpush1.msra.mxu0 0.0
        %346 = vmatprep.subr.mxu0 0.0
        %347 = vmatpush1.msra.mxu0 0.0
        %348 = vmatprep.subr.mxu0 0.0
        %349 = vmatpush1.msra.mxu0 0.0
        %350 = vmatprep.subr.mxu0 0.0
        %351 = vmatpush1.msra.mxu0 0.0
        %352 = vmatprep.subr.mxu0 0.0
        %353 = vmatpush1.msra.mxu0 0.0
        %354 = vmatprep.subr.mxu0 0.0
        %355 = vmatpush1.msra.mxu0 0.0
        %356 = vmatprep.subr.mxu0 0.0
        %357 = vmatpush1.msra.mxu0 0.0
        %358 = vmatprep.subr.mxu0 0.0
        %359 = vmatpush1.msra.mxu0 0.0
        %360 = vmatprep.mubr.f32.mxu0 0.0
        %361 = vmatmul.mubr.f32.gmra.mrb[0].mxu0 %v264
        %v362 = vpop.f32.mrb[0].mxu0
        %v363 = vadd.f32 %v221, %v362
        %v364 = vpop.f32.mrb[0].mxu0
        %v365 = vadd.f32 %v221, %v364
        %366 = vmatprep.mubr.f32.mxu0 0.0
        %367 = vmatmul.mubr.f32.gmra.mrb[0].mxu0 %v267
        %v368 = vpop.f32.mrb[0].mxu0
        %v369 = vadd.f32 %v226, %v368
        %v370 = vpop.f32.mrb[0].mxu0
        %v371 = vadd.f32 %v226, %v370
        %372 = vmatprep.mubr.f32.mxu0 0.0
        %373 = vmatmul.mubr.f32.gmra.mrb[0].mxu0 %v270
        %v374 = vpop.f32.mrb[0].mxu0
        %v375 = vadd.f32 %v231, %v374
        %v376 = vpop.f32.mrb[0].mxu0
        %v377 = vadd.f32 %v231, %v376
        %378 = vmatprep.mubr.f32.mxu0 0.0
        %379 = vmatmul.mubr.f32.gmra.mrb[0].mxu0 %v273
        %v380 = vpop.f32.mrb[0].mxu0
        %v381 = vadd.f32 %v236, %v380
        %v382 = vpop.f32.mrb[0].mxu0
        %v383 = vadd.f32 %v236, %v382
        %384 = vmatprep.mubr.f32.mxu0 0.0
        %385 = vmatmul.mubr.f32.gmra.mrb[0].mxu0 %v276
        %v386 = vpop.f32.mrb[0].mxu0
        %v387 = vadd.f32 %v241, %v386
        %v388 = vpop.f32.mrb[0].mxu0
        %v389 = vadd.f32 %v241, %v388
        %390 = vmatprep.mubr.f32.mxu0 0.0
        %391 = vmatmul.mubr.f32.gmra.mrb[0].mxu0 %v279
        %v392 = vpop.f32.mrb[0].mxu0
        %v393 = vadd.f32 %v246, %v392
        %v394 = vpop.f32.mrb[0].mxu0
        %v395 = vadd.f32 %v246, %v394
        %396 = vmatprep.mubr.f32.mxu0 0.0
        %397 = vmatmul.mubr.f32.gmra.mrb[0].mxu0 %v282
        %v398 = vpop.f32.mrb[0].mxu0
        %v399 = vadd.f32 %v251, %v398
        %v400 = vpop.f32.mrb[0].mxu0
        %v401 = vadd.f32 %v251, %v400
        %402 = vmatprep.mubr.f32.mxu0 0.0
        %403 = vmatmul.mubr.f32.gmra.mrb[0].mxu0 %v285
        %v404 = vpop.f32.mrb[0].mxu0
        %v405 = vadd.f32 %v256, %v404
        %v406 = vpop.f32.mrb[0].mxu0
        %v407 = vadd.f32 %v256, %v406
        %408 = vdwg.mxu0
        %409 = vmatprep.subr.mxu0 %v294
        %410 = vmatpush1.msra.mxu0 %v292
        %411 = vmatprep.subr.mxu0 0.0
        %412 = vmatpush1.msra.mxu0 0.0
        %413 = vmatprep.subr.mxu0 0.0
        %414 = vmatpush1.msra.mxu0 0.0
        %415 = vmatprep.subr.mxu0 0.0
        %416 = vmatpush1.msra.mxu0 0.0
        %417 = vmatprep.subr.mxu0 0.0
        %418 = vmatpush1.msra.mxu0 0.0
        %419 = vmatprep.subr.mxu0 0.0
        %420 = vmatpush1.msra.mxu0 0.0
        %421 = vmatprep.subr.mxu0 0.0
        %422 = vmatpush1.msra.mxu0 0.0
        %423 = vmatprep.subr.mxu0 0.0
        %424 = vmatpush1.msra.mxu0 0.0
        %425 = vmatprep.subr.mxu0 0.0
        %426 = vmatpush1.msra.mxu0 0.0
        %427 = vmatprep.subr.mxu0 0.0
        %428 = vmatpush1.msra.mxu0 0.0
        %429 = vmatprep.subr.mxu0 0.0
        %430 = vmatpush1.msra.mxu0 0.0
        %431 = vmatprep.subr.mxu0 0.0
        %432 = vmatpush1.msra.mxu0 0.0
        %433 = vmatprep.subr.mxu0 0.0
        %434 = vmatpush1.msra.mxu0 0.0
        %435 = vmatprep.subr.mxu0 0.0
        %436 = vmatpush1.msra.mxu0 0.0
        %437 = vmatprep.subr.mxu0 0.0
        %438 = vmatpush1.msra.mxu0 0.0
        %439 = vmatprep.subr.mxu0 0.0
        %440 = vmatpush1.msra.mxu0 0.0
        %441 = vmatprep.subr.mxu0 0.0
        %442 = vmatpush1.msra.mxu0 0.0
        %443 = vmatprep.subr.mxu0 0.0
        %444 = vmatpush1.msra.mxu0 0.0
        %445 = vmatprep.subr.mxu0 0.0
        %446 = vmatpush1.msra.mxu0 0.0
        %447 = vmatprep.subr.mxu0 0.0
        %448 = vmatpush1.msra.mxu0 0.0
        %449 = vmatprep.subr.mxu0 0.0
        %450 = vmatpush1.msra.mxu0 0.0
        %451 = vmatprep.subr.mxu0 0.0
        %452 = vmatpush1.msra.mxu0 0.0
        %453 = vmatprep.subr.mxu0 0.0
        %454 = vmatpush1.msra.mxu0 0.0
        %455 = vmatprep.subr.mxu0 0.0
        %456 = vmatpush1.msra.mxu0 0.0
        %457 = vmatprep.subr.mxu0 0.0
        %458 = vmatpush1.msra.mxu0 0.0
        %459 = vmatprep.subr.mxu0 0.0
        %460 = vmatpush1.msra.mxu0 0.0
        %461 = vmatprep.subr.mxu0 0.0
        %462 = vmatpush1.msra.mxu0 0.0
        %463 = vmatprep.subr.mxu0 0.0
        %464 = vmatpush1.msra.mxu0 0.0
        %465 = vmatprep.subr.mxu0 0.0
        %466 = vmatpush1.msra.mxu0 0.0
        %467 = vmatprep.subr.mxu0 0.0
        %468 = vmatpush1.msra.mxu0 0.0
        %469 = vmatprep.subr.mxu0 0.0
        %470 = vmatpush1.msra.mxu0 0.0
        %471 = vmatprep.subr.mxu0 0.0
        %472 = vmatpush1.msra.mxu0 0.0
        %473 = vmatprep.mubr.f32.mxu0 0.0
        %474 = vmatmul.mubr.f32.gmra.mrb[0].mxu0 %v264
        %v475 = vpop.f32.mrb[0].mxu0
        %v476 = vadd.f32 %v221, %v475
        %v477 = vpop.f32.mrb[0].mxu0
        %v478 = vadd.f32 %v221, %v477
        %479 = vmatprep.mubr.f32.mxu0 0.0
        %480 = vmatmul.mubr.f32.gmra.mrb[0].mxu0 %v267
        %v481 = vpop.f32.mrb[0].mxu0
        %v482 = vadd.f32 %v226, %v481
        %v483 = vpop.f32.mrb[0].mxu0
        %v484 = vadd.f32 %v226, %v483
        %485 = vmatprep.mubr.f32.mxu0 0.0
        %486 = vmatmul.mubr.f32.gmra.mrb[0].mxu0 %v270
        %v487 = vpop.f32.mrb[0].mxu0
        %v488 = vadd.f32 %v231, %v487
        %v489 = vpop.f32.mrb[0].mxu0
        %v490 = vadd.f32 %v231, %v489
        %491 = vmatprep.mubr.f32.mxu0 0.0
        %492 = vmatmul.mubr.f32.gmra.mrb[0].mxu0 %v273
        %v493 = vpop.f32.mrb[0].mxu0
        %v494 = vadd.f32 %v236, %v493
        %v495 = vpop.f32.mrb[0].mxu0
        %v496 = vadd.f32 %v236, %v495
        %497 = vmatprep.mubr.f32.mxu0 0.0
        %498 = vmatmul.mubr.f32.gmra.mrb[0].mxu0 %v276
        %v499 = vpop.f32.mrb[0].mxu0
        %v500 = vadd.f32 %v241, %v499
        %v501 = vpop.f32.mrb[0].mxu0
        %v502 = vadd.f32 %v241, %v501
        %503 = vmatprep.mubr.f32.mxu0 0.0
        %504 = vmatmul.mubr.f32.gmra.mrb[0].mxu0 %v279
        %v505 = vpop.f32.mrb[0].mxu0
        %v506 = vadd.f32 %v246, %v505
        %v507 = vpop.f32.mrb[0].mxu0
        %v508 = vadd.f32 %v246, %v507
        %509 = vmatprep.mubr.f32.mxu0 0.0
        %510 = vmatmul.mubr.f32.gmra.mrb[0].mxu0 %v282
        %v511 = vpop.f32.mrb[0].mxu0
        %v512 = vadd.f32 %v251, %v511
        %v513 = vpop.f32.mrb[0].mxu0
        %v514 = vadd.f32 %v251, %v513
        %515 = vmatprep.mubr.f32.mxu0 0.0
        %516 = vmatmul.mubr.f32.gmra.mrb[0].mxu0 %v285
        %v517 = vpop.f32.mrb[0].mxu0
        %v518 = vadd.f32 %v256, %v517
        %v519 = vpop.f32.mrb[0].mxu0
        %v520 = vadd.f32 %v256, %v519
        %521 = vdwg.mxu0
        %522 = vst [vmem:[%s188] sm:$0xff] %v363
        %523 = vst [vmem:[%s188 + $0x8] sm:$0xff] %v365
        %524 = vst [vmem:[%s188 + $0x10] sm:$0xff] %v476
        %525 = vst [vmem:[%s188 + $0x18] sm:$0xff] %v478
        %526 = vst [vmem:[%s188 + $0x20] sm:$0xff] %v369
        %527 = vst [vmem:[%s188 + $0x28] sm:$0xff] %v371
        %528 = vst [vmem:[%s188 + $0x30] sm:$0xff] %v482
        %529 = vst [vmem:[%s188 + $0x38] sm:$0xff] %v484
        %530 = vst [vmem:[%s188 + $0x40] sm:$0xff] %v375
        %531 = vst [vmem:[%s188 + $0x48] sm:$0xff] %v377
        %532 = vst [vmem:[%s188 + $0x50] sm:$0xff] %v488
        %533 = vst [vmem:[%s188 + $0x58] sm:$0xff] %v490
        %534 = vst [vmem:[%s188 + $0x60] sm:$0xff] %v381
        %535 = vst [vmem:[%s188 + $0x68] sm:$0xff] %v383
        %536 = vst [vmem:[%s188 + $0x70] sm:$0xff] %v494
        %537 = vst [vmem:[%s188 + $0x78] sm:$0xff] %v496
        %538 = vst [vmem:[%s188 + $0x80] sm:$0xff] %v387
        %539 = vst [vmem:[%s188 + $0x88] sm:$0xff] %v389
        %540 = vst [vmem:[%s188 + $0x90] sm:$0xff] %v500
        %541 = vst [vmem:[%s188 + $0x98] sm:$0xff] %v502
        %542 = vst [vmem:[%s188 + $0xa0] sm:$0xff] %v393
        %543 = vst [vmem:[%s188 + $0xa8] sm:$0xff] %v395
        %544 = vst [vmem:[%s188 + $0xb0] sm:$0xff] %v506
        %545 = vst [vmem:[%s188 + $0xb8] sm:$0xff] %v508
        %546 = vst [vmem:[%s188 + $0xc0] sm:$0xff] %v399
        %547 = vst [vmem:[%s188 + $0xc8] sm:$0xff] %v401
        %548 = vst [vmem:[%s188 + $0xd0] sm:$0xff] %v512
        %549 = vst [vmem:[%s188 + $0xd8] sm:$0xff] %v514
        %550 = vst [vmem:[%s188 + $0xe0] sm:$0xff] %v405
        %551 = vst [vmem:[%s188 + $0xe8] sm:$0xff] %v407
        %552 = vst [vmem:[%s188 + $0xf0] sm:$0xff] %v518
        %553 = vst [vmem:[%s188 + $0xf8] sm:$0xff] %v520
        %s554 = sand.u32 %s109, 1
        %s555 = scalar_lea.sflag [#allocation3], %s554
        %s556 = sand.u32 %s109, 1
        %s557 = smul.addr %s556, 256
        %s558 = scalar_lea.vmem [#allocation2], %s557
        // Predicated region
        $region33: #{tpu_custom_call.1} parent=31 // pred_check
          %p559 = pneg %p119
        $region34: #{tpu_custom_call.1} parent=31 // pred_check_branch
          %561 = sbr.rel (%p559) target = $region36
        $region35: #{tpu_custom_call.1} parent=31 // pred_region
          %s562 = smul.u32 4, %s22
          %s564 = ssub.s32 4096, 4096
          %565 = vsyncadd %s555, %s564
          %s566 = smul.addr %s21, 32
          %s567 = sadd.s32 %s562, %s566
          %s568 = smul.addr %s567, 128
          %s569 = scalar_lea.hbm %s3, %s568
          %s570 = sshll.u32 %s558, 4
          %s571 = int_to_ptr.vmem [resolvable:$true] %s570
          %576 = dma.vmem_to_hbm [thread:$0]  %s571, 4096, %s569, %s555, 512, 512, 32
        $region36: #{tpu_custom_call.1} parent=31 // pred_fallthru
          _
      $region32: #{tpu_custom_call.1} parent=5 // pred_fallthru
        _
      %p577 = scmp.le.s32.totalorder 2, %s12
      // Predicated region
      $region37: #{tpu_custom_call.1} parent=5 // pred_check
        %p578 = pneg %p577
      $region38: #{tpu_custom_call.1} parent=5 // pred_check_branch
        %580 = sbr.rel (%p578) target = $region40
      $region39: #{tpu_custom_call.1} parent=5 // pred_region
        %s581 = ssub.s32 %s12, 2
        // Predicated region
        $region41: #{tpu_custom_call.1} parent=39 // pred_check
          %p582 = pneg %p125
        $region42: #{tpu_custom_call.1} parent=39 // pred_check_branch
          %584 = sbr.rel (%p582) target = $region44
        $region43: #{tpu_custom_call.1} parent=39 // pred_region
          %s585 = sand.u32 %s110, 1
          %s586 = scalar_lea.sflag [#allocation3], %s585
          %s587 = sand.u32 %s110, 1
          %s588 = smul.addr %s587, 256
          %s589 = scalar_lea.vmem [#allocation2], %s588
          %590 = dma.done %s586, 4096
        $region44: #{tpu_custom_call.1} parent=39 // pred_fallthru
          _
      $region40: #{tpu_custom_call.1} parent=5 // pred_fallthru
        _
    $region6: #{tpu_custom_call.1} parent=1 // loop_footer
      %s16 = sadd.s32 1, %s12
    $region7: #{tpu_custom_call.1} parent=1 // loop_footer_branch
      %11 = sbr.rel target = $region3
    $region8: #{tpu_custom_call.1} parent=1 // loop_exit
      _
    %591 = vsyncpa [#allocation3], 1
    %s592 = scalar_lea.sflag [#allocation3], 1
    %593 = vsyncpa %s592, 1

</llo_original>
